<compile_context>
chip_gen: v5e
topology: v5e:2x2
jax: 0.10.0
libtpu: 0.0.40
codegen_flags: <defaults>
</compile_context>

<pallas_src>
import functools

import jax
import jax.numpy as jnp
from jax import lax
from jax.experimental import pallas as pl
from jax.experimental.pallas import tpu as pltpu


# ----------------------------- helpers ------------------------------------- #

def _round_up(x, m):
    return ((x + m - 1) // m) * m


def _tensorcores_per_chip():
    """Best-effort detection: v7x has 2 TensorCores/chip, v5e/v6e have 1."""
    try:
        kind = jax.devices()[0].device_kind.lower()
        return 2 if "v7" in kind else 1
    except Exception:
        return 1


# ----------------------------- kernel -------------------------------------- #

def critic_kernel(s_ref, a_ref, w1s_ref, w1a_ref, b1_ref,
                  w2_ref, b2_ref, w3_ref, b3_ref, o_ref,
                  *, bf16_epilogue: bool):
    # Layer 1: split-weight matmul replaces concat([state, action]) @ W1.
    # bf16 MXU inputs, f32 accumulation.
    h1 = (jnp.dot(s_ref[...].astype(jnp.bfloat16), w1s_ref[...],
                  preferred_element_type=jnp.float32)
          + jnp.dot(a_ref[...].astype(jnp.bfloat16), w1a_ref[...],
                    preferred_element_type=jnp.float32))
    if bf16_epilogue:
        # Halves VPU vreg traffic for the epilogue (v6e/v7x only; keep f32 on v5e).
        h1 = jnp.maximum(h1.astype(jnp.bfloat16)
                         + b1_ref[...].astype(jnp.bfloat16), 0)
        h1_mm = h1
    else:
        h1 = jnp.maximum(h1 + b1_ref[...], 0.0)
        h1_mm = h1.astype(jnp.bfloat16)

    # Layer 2: (tile, 400) @ (400, 300) + b2, ReLU.
    h2 = jnp.dot(h1_mm, w2_ref[...], preferred_element_type=jnp.float32)
    if bf16_epilogue:
        h2 = jnp.maximum(h2.astype(jnp.bfloat16)
                         + b2_ref[...].astype(jnp.bfloat16), 0)
        h2_mm = h2
    else:
        h2 = jnp.maximum(h2 + b2_ref[...], 0.0)
        h2_mm = h2.astype(jnp.bfloat16)

    # Layer 3 (out_features == 1): M=1 MXU matmul producing a *lane-dense*
    # (1, tile) row: w3 (1, 300) contracted with h2 (tile, 300) along dim 300.
    q = lax.dot_general(w3_ref[...], h2_mm,
                        dimension_numbers=(((1,), (1,)), ((), ())),
                        preferred_element_type=jnp.float32)
    # b3 is a scalar living in SMEM.
    o_ref[...] = q + b3_ref[0, 0]


# ----------------------------- wrapper -------------------------------------- #

def critic_forward(state, action, params, *, tile_b=1024, bf16_epilogue=False):
    """params = (w1s, w1a, b1, w2, b2, w3_row, b3) from init_critic_params().
    Returns (B, 1) f32 Q-values."""
    w1s, w1a, b1, w2, b2, w3, b3 = params

    state = state.astype(jnp.float32)
    action = action.astype(jnp.float32)
    B, state_dim = state.shape
    action_dim = action.shape[1]
    h1_dim = w1s.shape[1]
    h2_dim = w2.shape[1]

    # --- tile / grid selection -------------------------------------------- #
    # Pad only to a multiple of 8, then pick balanced tiles.  On a 2-TC chip
    # force at least 2 (even) grid steps so "parallel" sharding has work for
    # both cores; on 1-TC chips prefer one fat tile (grid overhead amortizes).
    b8 = _round_up(B, 8)
    num_tiles = max(1, pl.cdiv(b8, tile_b))
    if _tensorcores_per_chip() == 2 and b8 >= 16:
        num_tiles = max(num_tiles, 2)
        if num_tiles % 2:
            num_tiles += 1
    tile = _round_up(pl.cdiv(b8, num_tiles), 8)
    b_pad = num_tiles * tile

    if b_pad != B:
        pad = b_pad - B
        state = jnp.pad(state, ((0, pad), (0, 0)))
        action = jnp.pad(action, ((0, pad), (0, 0)))

    # Activation tiles step along the batch grid; weights/biases are constant
    # blocks, resident in VMEM across the whole grid.
    act_spec = lambda d: pl.BlockSpec((tile, d), lambda i: (i, 0))
    const_spec = lambda shape: pl.BlockSpec(shape, lambda i: (0, 0))

    d_in = state_dim + action_dim
    flops = 2 * b_pad * (d_in * h1_dim + h1_dim * h2_dim + h2_dim)
    bytes_accessed = (4 * b_pad * (d_in + 1)                       # activations
                      + 2 * (d_in * h1_dim + h1_dim * h2_dim + h2_dim)  # bf16 W
                      + 4 * (h1_dim + h2_dim + 1))                 # f32 biases

    out = pl.pallas_call(
        functools.partial(critic_kernel, bf16_epilogue=bf16_epilogue),
        out_shape=jax.ShapeDtypeStruct((num_tiles, tile), jnp.float32),
        grid=(num_tiles,),
        in_specs=[
            act_spec(state_dim),                 # state
            act_spec(action_dim),                # action
            const_spec((state_dim, h1_dim)),     # w1s (bf16)
            const_spec((action_dim, h1_dim)),    # w1a (bf16)
            const_spec((1, h1_dim)),             # b1  (f32)
            const_spec((h1_dim, h2_dim)),        # w2  (bf16)
            const_spec((1, h2_dim)),             # b2  (f32)
            const_spec((1, h2_dim)),             # w3 row (bf16)
            pl.BlockSpec(memory_space=pltpu.MemorySpace.SMEM),  # b3 scalar
        ],
        # Lane-dense output: one (1, tile) row per grid step.
        out_specs=pl.BlockSpec((1, tile), lambda i: (i, 0)),
        compiler_params=pltpu.CompilerParams(
            dimension_semantics=("parallel",)),
        cost_estimate=pl.CostEstimate(
            flops=flops, transcendentals=0, bytes_accessed=bytes_accessed),
    )(state, action, w1s, w1a, b1, w2, b2, w3, b3)

    # (num_tiles, tile) rows are in batch order; padded rows are garbage and
    # must be sliced off here.
    return out.reshape(-1, 1)[:B]


# ----------------------------- params --------------------------------------- #

def init_critic_params(key, state_dim, action_dim):
    """PyTorch nn.Linear-style init: U(-1/sqrt(fan_in), 1/sqrt(fan_in)).

    Returns (master, device):
      master: f32 tuple (w1, b1, w2, b2, w3, b3) for the pure-JAX reference.
      device: (w1s, w1a, b1, w2, b2, w3_row, b3) used by the kernel — matmul
              weights in bf16, element-wise params in f32, w1 pre-split so the
              kernel never needs a concat, w3 stored as a (1, 300) row.
    """
    d_in = state_dim + action_dim
    dims = [(d_in, 400), (400, 300), (300, 1)]
    raw = []
    for fan_in, fan_out in dims:
        key, kw, kb = jax.random.split(key, 3)
        bound = 1.0 / float(fan_in) ** 0.5
        w = jax.random.uniform(kw, (fan_in, fan_out), jnp.float32, -bound, bound)
        b = jax.random.uniform(kb, (1, fan_out), jnp.float32, -bound, bound)
        raw.extend([w, b])
    w1, b1, w2, b2, w3, b3 = raw

    master = (w1, b1, w2, b2, w3, b3)
    device = (
        w1[:state_dim].astype(jnp.bfloat16),    # w1s
        w1[state_dim:].astype(jnp.bfloat16),    # w1a
        b1,                                     # f32
        w2.astype(jnp.bfloat16),
        b2,                                     # f32
        w3.reshape(1, 300).astype(jnp.bfloat16),  # w3 row for M=1 MXU matmul
        b3,                                     # (1,1) f32, lives in SMEM
    )
    return master, device


# ----------------------------- references ----------------------------------- #

def critic_reference_f32(state, action, master):
    w1, b1, w2, b2, w3, b3 = master
    x = jnp.concatenate([state, action], axis=1)
    h1 = jnp.maximum(x @ w1 + b1, 0.0)
    h2 = jnp.maximum(h1 @ w2 + b2, 0.0)
    return h2 @ w3 + b3


def critic_reference_bf16(state, action, device):
    # Mirrors the kernel numerics (bf16 matmul inputs, f32 accumulation,
    # f32 epilogue — the kernel's default path).
    w1s, w1a, b1, w2, b2, w3, b3 = device
    h1 = (jnp.dot(state.astype(jnp.bfloat16), w1s,
                  preferred_element_type=jnp.float32)
          + jnp.dot(action.astype(jnp.bfloat16), w1a,
                    preferred_element_type=jnp.float32) + b1)
    h1 = jnp.maximum(h1, 0.0)
    h2 = jnp.dot(h1.astype(jnp.bfloat16), w2,
                 preferred_element_type=jnp.float32) + b2
    h2 = jnp.maximum(h2, 0.0)
    q_row = lax.dot_general(w3, h2.astype(jnp.bfloat16),
                            dimension_numbers=(((1,), (1,)), ((), ())),
                            preferred_element_type=jnp.float32)   # (1, B)
    return q_row.T + b3


# ----------------------------- demo ------------------------------------------ #

if __name__ == "__main__":
    B, state_dim, action_dim = 8, 16, 8

    key = jax.random.PRNGKey(0)
    key, ks, ka, kp = jax.random.split(key, 4)
    state = jax.random.normal(ks, (B, state_dim), jnp.float32)
    action = jax.random.normal(ka, (B, action_dim), jnp.float32)
    master, device = init_critic_params(kp, state_dim, action_dim)

    q = jax.block_until_ready(critic_forward(state, action, device))
    assert q.shape == (B, 1)

    # Tight check vs a reference that mirrors the kernel's bf16/f32 numerics.
    q_bf16_ref = critic_reference_bf16(state, action, device)
    assert jnp.allclose(q, q_bf16_ref, atol=2e-3, rtol=2e-3), \
        "mismatch vs bf16-matched reference"

    # Loose semantic check vs the full-f32 PyTorch-equivalent forward.
    q_f32_ref = critic_reference_f32(state, action, master)
    assert jnp.allclose(q, q_f32_ref, atol=5e-2, rtol=5e-2), \
        "mismatch vs f32 reference"

    print("KERNEL_OK")
</pallas_src>

<mosaic_0001>
module attributes {stable_mosaic.version = 11 : i64} {
  func.func @critic_kernel(%arg0: i32, %arg1: memref<8x16xf32, #tpu.memory_space<vmem>>, %arg2: memref<8x8xf32, #tpu.memory_space<vmem>>, %arg3: memref<16x400xbf16, #tpu.memory_space<vmem>>, %arg4: memref<8x400xbf16, #tpu.memory_space<vmem>>, %arg5: memref<1x400xf32, #tpu.memory_space<vmem>>, %arg6: memref<400x300xbf16, #tpu.memory_space<vmem>>, %arg7: memref<1x300xf32, #tpu.memory_space<vmem>>, %arg8: memref<1x300xbf16, #tpu.memory_space<vmem>>, %arg9: memref<1x1xf32, #tpu.memory_space<smem>>, %arg10: memref<1x8xf32, #tpu.memory_space<vmem>>) attributes {dimension_semantics = [#tpu.dimension_semantics<parallel>], iteration_bounds = array<i64: 1>, scalar_prefetch = 0 : i64, scratch_operands = 0 : i64, tpu.core_type = #tpu.core_type<tc>, window_params = [{transform_indices = @transform_0, window_bounds = array<i64: 8, 16>}, {transform_indices = @transform_1, window_bounds = array<i64: 8, 8>}, {pipeline_mode = #tpu.pipeline_mode<synchronous>, transform_indices = @transform_2, window_bounds = array<i64: 16, 400>}, {pipeline_mode = #tpu.pipeline_mode<synchronous>, transform_indices = @transform_3, window_bounds = array<i64: 8, 400>}, {pipeline_mode = #tpu.pipeline_mode<synchronous>, transform_indices = @transform_4, window_bounds = array<i64: 1, 400>}, {pipeline_mode = #tpu.pipeline_mode<synchronous>, transform_indices = @transform_5, window_bounds = array<i64: 400, 300>}, {pipeline_mode = #tpu.pipeline_mode<synchronous>, transform_indices = @transform_6, window_bounds = array<i64: 1, 300>}, {pipeline_mode = #tpu.pipeline_mode<synchronous>, transform_indices = @transform_7, window_bounds = array<i64: 1, 300>}, {transform_indices = @transform_8, window_bounds = array<i64: 1, 1>}, {transform_indices = @transform_9, window_bounds = array<i64: 1, 8>}]} {
    %c0 = arith.constant 0 : index
    %c0_0 = arith.constant 0 : index
    %0 = vector.load %arg1[%c0, %c0_0] : memref<8x16xf32, #tpu.memory_space<vmem>>, vector<8x16xf32>
    %1 = arith.truncf %0 : vector<8x16xf32> to vector<8x16xbf16>
    %c0_1 = arith.constant 0 : index
    %c0_2 = arith.constant 0 : index
    %2 = vector.load %arg3[%c0_1, %c0_2] : memref<16x400xbf16, #tpu.memory_space<vmem>>, vector<16x400xbf16>
    %cst = arith.constant dense<0.000000e+00> : vector<8x400xf32>
    %3 = tpu.matmul %1, %2, %cst {dimension_numbers = #tpu.dot_dimension_numbers<[1], [0], [0], [1], [0, 0, 1, 1], [], []>} : vector<8x16xbf16>, vector<16x400xbf16>, vector<8x400xf32> -> vector<8x400xf32>
    %c0_3 = arith.constant 0 : index
    %c0_4 = arith.constant 0 : index
    %4 = vector.load %arg2[%c0_3, %c0_4] : memref<8x8xf32, #tpu.memory_space<vmem>>, vector<8x8xf32>
    %5 = arith.truncf %4 : vector<8x8xf32> to vector<8x8xbf16>
    %c0_5 = arith.constant 0 : index
    %c0_6 = arith.constant 0 : index
    %6 = vector.load %arg4[%c0_5, %c0_6] : memref<8x400xbf16, #tpu.memory_space<vmem>>, vector<8x400xbf16>
    %cst_7 = arith.constant dense<0.000000e+00> : vector<8x400xf32>
    %7 = tpu.matmul %5, %6, %cst_7 {dimension_numbers = #tpu.dot_dimension_numbers<[1], [0], [0], [1], [0, 0, 1, 1], [], []>} : vector<8x8xbf16>, vector<8x400xbf16>, vector<8x400xf32> -> vector<8x400xf32>
    %8 = arith.addf %3, %7 : vector<8x400xf32>
    %c0_8 = arith.constant 0 : index
    %c0_9 = arith.constant 0 : index
    %9 = vector.load %arg5[%c0_8, %c0_9] : memref<1x400xf32, #tpu.memory_space<vmem>>, vector<1x400xf32>
    %10 = vector.broadcast %9 : vector<1x400xf32> to vector<8x400xf32>
    %11 = arith.addf %8, %10 : vector<8x400xf32>
    %cst_10 = arith.constant 0.000000e+00 : f32
    %12 = vector.broadcast %cst_10 : f32 to vector<8x400xf32>
    %13 = arith.maximumf %11, %12 : vector<8x400xf32>
    %14 = arith.truncf %13 : vector<8x400xf32> to vector<8x400xbf16>
    %c0_11 = arith.constant 0 : index
    %c0_12 = arith.constant 0 : index
    %15 = vector.load %arg6[%c0_11, %c0_12] : memref<400x300xbf16, #tpu.memory_space<vmem>>, vector<400x300xbf16>
    %cst_13 = arith.constant dense<0.000000e+00> : vector<8x300xf32>
    %16 = tpu.matmul %14, %15, %cst_13 {dimension_numbers = #tpu.dot_dimension_numbers<[1], [0], [0], [1], [0, 0, 1, 1], [], []>} : vector<8x400xbf16>, vector<400x300xbf16>, vector<8x300xf32> -> vector<8x300xf32>
    %c0_14 = arith.constant 0 : index
    %c0_15 = arith.constant 0 : index
    %17 = vector.load %arg7[%c0_14, %c0_15] : memref<1x300xf32, #tpu.memory_space<vmem>>, vector<1x300xf32>
    %18 = vector.broadcast %17 : vector<1x300xf32> to vector<8x300xf32>
    %19 = arith.addf %16, %18 : vector<8x300xf32>
    %cst_16 = arith.constant 0.000000e+00 : f32
    %20 = vector.broadcast %cst_16 : f32 to vector<8x300xf32>
    %21 = arith.maximumf %19, %20 : vector<8x300xf32>
    %22 = arith.truncf %21 : vector<8x300xf32> to vector<8x300xbf16>
    %c0_17 = arith.constant 0 : index
    %c0_18 = arith.constant 0 : index
    %23 = vector.load %arg8[%c0_17, %c0_18] : memref<1x300xbf16, #tpu.memory_space<vmem>>, vector<1x300xbf16>
    %cst_19 = arith.constant dense<0.000000e+00> : vector<1x8xf32>
    %24 = tpu.matmul %23, %22, %cst_19 {dimension_numbers = #tpu.dot_dimension_numbers<[1], [1], [0], [0], [0, 0, 1, 0], [], []>} : vector<1x300xbf16>, vector<8x300xbf16>, vector<1x8xf32> -> vector<1x8xf32>
    %c0_20 = arith.constant 0 : index
    %c0_21 = arith.constant 0 : index
    %25 = memref.load %arg9[%c0_20, %c0_21] : memref<1x1xf32, #tpu.memory_space<smem>>
    %26 = vector.broadcast %25 : f32 to vector<1x8xf32>
    %27 = arith.addf %24, %26 : vector<1x8xf32>
    %c0_22 = arith.constant 0 : index
    %c0_23 = arith.constant 0 : index
    %28 = vector.load %arg10[%c0_22, %c0_23] : memref<1x8xf32, #tpu.memory_space<vmem>>, vector<1x8xf32>
    tpu.vector_store %arg10[%c0_22, %c0_23], %27 {strides = array<i32>} : memref<1x8xf32, #tpu.memory_space<vmem>>, vector<1x8xf32>,
    return
  }
  func.func @transform_0(%arg0: i32) -> (i32, i32) {
    %c0_i32 = arith.constant 0 : i32
    %c0_i32_0 = arith.constant 0 : i32
    return %arg0, %c0_i32 : i32, i32
  }
  func.func @transform_1(%arg0: i32) -> (i32, i32) {
    %c0_i32 = arith.constant 0 : i32
    %c0_i32_0 = arith.constant 0 : i32
    return %arg0, %c0_i32 : i32, i32
  }
  func.func @transform_2(%arg0: i32) -> (i32, i32) {
    %c0_i32 = arith.constant 0 : i32
    %c0_i32_0 = arith.constant 0 : i32
    %c0_i32_1 = arith.constant 0 : i32
    return %c0_i32, %c0_i32_0 : i32, i32
  }
  func.func @transform_3(%arg0: i32) -> (i32, i32) {
    %c0_i32 = arith.constant 0 : i32
    %c0_i32_0 = arith.constant 0 : i32
    %c0_i32_1 = arith.constant 0 : i32
    return %c0_i32, %c0_i32_0 : i32, i32
  }
  func.func @transform_4(%arg0: i32) -> (i32, i32) {
    %c0_i32 = arith.constant 0 : i32
    %c0_i32_0 = arith.constant 0 : i32
    %c0_i32_1 = arith.constant 0 : i32
    return %c0_i32, %c0_i32_0 : i32, i32
  }
  func.func @transform_5(%arg0: i32) -> (i32, i32) {
    %c0_i32 = arith.constant 0 : i32
    %c0_i32_0 = arith.constant 0 : i32
    %c0_i32_1 = arith.constant 0 : i32
    return %c0_i32, %c0_i32_0 : i32, i32
  }
  func.func @transform_6(%arg0: i32) -> (i32, i32) {
    %c0_i32 = arith.constant 0 : i32
    %c0_i32_0 = arith.constant 0 : i32
    %c0_i32_1 = arith.constant 0 : i32
    return %c0_i32, %c0_i32_0 : i32, i32
  }
  func.func @transform_7(%arg0: i32) -> (i32, i32) {
    %c0_i32 = arith.constant 0 : i32
    %c0_i32_0 = arith.constant 0 : i32
    %c0_i32_1 = arith.constant 0 : i32
    return %c0_i32, %c0_i32_0 : i32, i32
  }
  func.func @transform_8(%arg0: i32) -> (i32, i32) {
    %c0_i32 = arith.constant 0 : i32
    %c0_i32_0 = arith.constant 0 : i32
    %c0_i32_1 = arith.constant 0 : i32
    return %c0_i32, %c0_i32_0 : i32, i32
  }
  func.func @transform_9(%arg0: i32) -> (i32, i32) {
    %c0_i32 = arith.constant 0 : i32
    %c0_i32_0 = arith.constant 0 : i32
    return %arg0, %c0_i32 : i32, i32
  }
}

</mosaic_0001>

<llo_original>
// kernel: tpu_custom_call.1
$region0: #{tpu_custom_call.1}
  #allocation0 [shape = 'u32[]', space=smem, size = 0x4, offset = 0x4, fixed_abs, tag = 'smem constant byte address 0x4 - core index']
  #allocation1 [shape = 'u32[72,128]{1,0:T(1,128)}', space=vmem, size = 0x9000, scoped, tag = 'internal scratch']
  #allocation2 [shape = 'f32[1,1]{1,0:T(1,128)S(6)}', space=smem, size = 0x200, scoped, tag = 'scoped memory for tpu_custom_call.1']
  %s0 = inlined_call_operand.hbm [shape: f32[8,16], index: 0, kind: input, shape index: {}]
  %s1 = inlined_call_operand.hbm [shape: f32[8,8], index: 1, kind: input, shape index: {}]
  %s2 = inlined_call_operand.hbm [shape: bf16[16,400], index: 2, kind: input, shape index: {}]
  %s3 = inlined_call_operand.hbm [shape: bf16[8,400], index: 3, kind: input, shape index: {}]
  %s4 = inlined_call_operand.vmem [shape: f32[1,400], index: 4, kind: input, shape index: {}]
  %s5 = inlined_call_operand.hbm [shape: bf16[400,300], index: 5, kind: input, shape index: {}]
  %s6 = inlined_call_operand.vmem [shape: f32[1,300], index: 6, kind: input, shape index: {}]
  %s7 = inlined_call_operand.hbm [shape: bf16[1,300], index: 7, kind: input, shape index: {}]
  %s8 = inlined_call_operand.<no memory space> [shape: f32[1,1], index: 8, kind: input, shape index: {}]
  %s9 = inlined_call_operand.hbm [shape: f32[1,8], index: 9, kind: output, shape index: {}]
  %s10 = sld [smem:[#allocation0]]
  $region70: #{tpu_custom_call.1} parent=0
    _
  %s12 = ssub.s32 1, %s10
  %s13 = scalar_select 0, %s12, %s10
  %14 = sst [smem:[#allocation2]] %s8
  $region1: #{tpu_custom_call.1} parent=0
    #allocation3 [shape = 'u8[4096]{0}', space=vmem, size = 0x1000, scoped, tag = 'input window, operand 0, single buffered']
    #allocation4 [shape = 's32[1]{0}', space=sflag, size = 0x4, scoped, tag = 'scoped memory for tpu_custom_call.1']
    #allocation5 [shape = 's32[1]{0}', space=sflag, size = 0x4, scoped, tag = 'scoped memory for tpu_custom_call.1']
    #allocation6 [shape = 'u8[4096]{0}', space=vmem, size = 0x1000, scoped, tag = 'input window, operand 1, single buffered']
    #allocation7 [shape = 's32[1]{0}', space=sflag, size = 0x4, scoped, tag = 'scoped memory for tpu_custom_call.1']
    #allocation8 [shape = 'u8[16384]{0}', space=vmem, size = 0x4000, scoped, tag = 'input window, operand 2, single buffered']
    #allocation9 [shape = 'u8[8192]{0}', space=vmem, size = 0x2000, scoped, tag = 'input window, operand 3, single buffered']
    #allocation10 [shape = 's32[1]{0}', space=sflag, size = 0x4, scoped, tag = 'scoped memory for tpu_custom_call.1']
    #allocation11 [shape = 'u8[307200]{0}', space=vmem, size = 0x4b000, scoped, tag = 'input window, operand 5, single buffered']
    #allocation12 [shape = 'u8[1536]{0}', space=vmem, size = 0x800, scoped, tag = 'input window, operand 7, single buffered']
    #allocation13 [shape = 's32[1]{0}', space=sflag, size = 0x4, scoped, tag = 'scoped memory for tpu_custom_call.1']
    #allocation14 [shape = 'u8[512]{0}', space=vmem, size = 0x400, scoped, tag = 'output window, operand 0, single buffered']
    %15 = vsyncpa [#allocation4], 0
    %16 = vsyncpa [#allocation7], 0
    %17 = vsyncpa [#allocation10], 0
    %18 = vsyncpa [#allocation13], 0
    %19 = vsyncpa [#allocation5], 0
    // Predicated region
    $region2: #{tpu_custom_call.1} parent=1 // pred_check
      _
    $region3: #{tpu_custom_call.1} parent=1 // pred_check_branch
      %21 = sbr.rel (0) target = $region5
    $region4: #{tpu_custom_call.1} parent=1 // pred_region
      %23 = vsyncadd [#allocation4], 0
      %s25 = sshll.u32 %s0, 4
      %s26 = int_to_ptr.hbm [resolvable:$true] %s25
      %s27 = sshll.u32 [#allocation3], 4
      %s28 = int_to_ptr.vmem [resolvable:$true] %s27
      %30 = dma.hbm_to_vmem [thread:$0]  %s26, 128, %s28, [#allocation4]
    $region5: #{tpu_custom_call.1} parent=1 // pred_fallthru
      _
    // Predicated region
    $region6: #{tpu_custom_call.1} parent=1 // pred_check
      _
    $region7: #{tpu_custom_call.1} parent=1 // pred_check_branch
      %32 = sbr.rel (0) target = $region9
    $region8: #{tpu_custom_call.1} parent=1 // pred_region
      %34 = vsyncadd [#allocation7], 0
      %s36 = sshll.u32 %s1, 4
      %s37 = int_to_ptr.hbm [resolvable:$true] %s36
      %s38 = sshll.u32 [#allocation6], 4
      %s39 = int_to_ptr.vmem [resolvable:$true] %s38
      %41 = dma.hbm_to_vmem [thread:$0]  %s37, 128, %s39, [#allocation7]
    $region9: #{tpu_custom_call.1} parent=1 // pred_fallthru
      _
    // Predicated region
    $region10: #{tpu_custom_call.1} parent=1 // pred_check
      _
    $region11: #{tpu_custom_call.1} parent=1 // pred_check_branch
      %43 = sbr.rel (0) target = $region13
    $region12: #{tpu_custom_call.1} parent=1 // pred_region
      %45 = vsyncadd [#allocation7], 0
      %s46 = sshll.u32 %s2, 4
      %s47 = int_to_ptr.hbm [resolvable:$true] %s46
      %s48 = sshll.u32 [#allocation8], 4
      %s49 = int_to_ptr.vmem [resolvable:$true] %s48
      %54 = dma.hbm_to_vmem [thread:$0]  %s47, 512, %s49, [#allocation7], 256, 256, 16
    $region13: #{tpu_custom_call.1} parent=1 // pred_fallthru
      _
    // Predicated region
    $region14: #{tpu_custom_call.1} parent=1 // pred_check
      _
    $region15: #{tpu_custom_call.1} parent=1 // pred_check_branch
      %56 = sbr.rel (0) target = $region17
    $region16: #{tpu_custom_call.1} parent=1 // pred_region
      %58 = vsyncadd [#allocation10], 0
      %s60 = sshll.u32 %s3, 4
      %s61 = int_to_ptr.hbm [resolvable:$true] %s60
      %s62 = sshll.u32 [#allocation9], 4
      %s63 = int_to_ptr.vmem [resolvable:$true] %s62
      %65 = dma.hbm_to_vmem [thread:$0]  %s61, 256, %s63, [#allocation10]
    $region17: #{tpu_custom_call.1} parent=1 // pred_fallthru
      _
    // Predicated region
    $region18: #{tpu_custom_call.1} parent=1 // pred_check
      _
    $region19: #{tpu_custom_call.1} parent=1 // pred_check_branch
      %67 = sbr.rel (0) target = $region21
    $region20: #{tpu_custom_call.1} parent=1 // pred_region
      _
    $region21: #{tpu_custom_call.1} parent=1 // pred_fallthru
      _
    // Predicated region
    $region22: #{tpu_custom_call.1} parent=1 // pred_check
      _
    $region23: #{tpu_custom_call.1} parent=1 // pred_check_branch
      %69 = sbr.rel (0) target = $region25
    $region24: #{tpu_custom_call.1} parent=1 // pred_region
      %71 = vsyncadd [#allocation10], 0
      %s72 = sshll.u32 %s5, 4
      %s73 = int_to_ptr.hbm [resolvable:$true] %s72
      %s74 = sshll.u32 [#allocation11], 4
      %s75 = int_to_ptr.vmem [resolvable:$true] %s74
      %80 = dma.hbm_to_vmem [thread:$0]  %s73, 9600, %s75, [#allocation10], 192, 192, 12
    $region25: #{tpu_custom_call.1} parent=1 // pred_fallthru
      _
    // Predicated region
    $region26: #{tpu_custom_call.1} parent=1 // pred_check
      _
    $region27: #{tpu_custom_call.1} parent=1 // pred_check_branch
      %82 = sbr.rel (0) target = $region29
    $region28: #{tpu_custom_call.1} parent=1 // pred_region
      _
    $region29: #{tpu_custom_call.1} parent=1 // pred_fallthru
      _
    // Predicated region
    $region30: #{tpu_custom_call.1} parent=1 // pred_check
      _
    $region31: #{tpu_custom_call.1} parent=1 // pred_check_branch
      %84 = sbr.rel (0) target = $region33
    $region32: #{tpu_custom_call.1} parent=1 // pred_region
      %86 = vsyncadd [#allocation13], 0
      %s88 = sshll.u32 %s7, 4
      %s89 = int_to_ptr.hbm [resolvable:$true] %s88
      %s90 = sshll.u32 [#allocation12], 4
      %s91 = int_to_ptr.vmem [resolvable:$true] %s90
      %93 = dma.hbm_to_vmem [thread:$0]  %s89, 48, %s91, [#allocation13]
    $region33: #{tpu_custom_call.1} parent=1 // pred_fallthru
      _
    // Predicated region
    $region34: #{tpu_custom_call.1} parent=1 // pred_check
      _
    $region35: #{tpu_custom_call.1} parent=1 // pred_check_branch
      %95 = sbr.rel (0) target = $region37
    $region36: #{tpu_custom_call.1} parent=1 // pred_region
      _
    $region37: #{tpu_custom_call.1} parent=1 // pred_fallthru
      _
    // Predicated region
    $region38: #{tpu_custom_call.1} parent=1 // pred_check
      _
    $region39: #{tpu_custom_call.1} parent=1 // pred_check_branch
      %97 = sbr.rel (0) target = $region41
    $region40: #{tpu_custom_call.1} parent=1 // pred_region
      %99 = dma.done [#allocation4], 128
    $region41: #{tpu_custom_call.1} parent=1 // pred_fallthru
      _
    // Predicated region
    $region42: #{tpu_custom_call.1} parent=1 // pred_check
      _
    $region43: #{tpu_custom_call.1} parent=1 // pred_check_branch
      %101 = sbr.rel (0) target = $region45
    $region44: #{tpu_custom_call.1} parent=1 // pred_region
      %103 = dma.done [#allocation7], 128
    $region45: #{tpu_custom_call.1} parent=1 // pred_fallthru
      _
    // Predicated region
    $region46: #{tpu_custom_call.1} parent=1 // pred_check
      _
    $region47: #{tpu_custom_call.1} parent=1 // pred_check_branch
      %105 = sbr.rel (0) target = $region49
    $region48: #{tpu_custom_call.1} parent=1 // pred_region
      %107 = dma.done [#allocation7], 512
    $region49: #{tpu_custom_call.1} parent=1 // pred_fallthru
      _
    // Predicated region
    $region50: #{tpu_custom_call.1} parent=1 // pred_check
      _
    $region51: #{tpu_custom_call.1} parent=1 // pred_check_branch
      %109 = sbr.rel (0) target = $region53
    $region52: #{tpu_custom_call.1} parent=1 // pred_region
      %111 = dma.done [#allocation10], 256
    $region53: #{tpu_custom_call.1} parent=1 // pred_fallthru
      _
    // Predicated region
    $region54: #{tpu_custom_call.1} parent=1 // pred_check
      _
    $region55: #{tpu_custom_call.1} parent=1 // pred_check_branch
      %113 = sbr.rel (0) target = $region57
    $region56: #{tpu_custom_call.1} parent=1 // pred_region
      %115 = dma.done [#allocation10], 9600
    $region57: #{tpu_custom_call.1} parent=1 // pred_fallthru
      _
    // Predicated region
    $region58: #{tpu_custom_call.1} parent=1 // pred_check
      _
    $region59: #{tpu_custom_call.1} parent=1 // pred_check_branch
      %117 = sbr.rel (0) target = $region61
    $region60: #{tpu_custom_call.1} parent=1 // pred_region
      %119 = dma.done [#allocation13], 48
    $region61: #{tpu_custom_call.1} parent=1 // pred_fallthru
      _
    %v121 = vld [vmem:[#allocation3] sm:$0xff]
    %v122 = vpack.c.bf16 %v121, %v121
    %v123 = vld [vmem:[#allocation8] sm:$0xff]
    %v124 = vld [vmem:[#allocation8 + $0x8] sm:$0xff]
    %v125 = vld [vmem:[#allocation8 + $0x10] sm:$0xff]
    %v126 = vld [vmem:[#allocation8 + $0x18] sm:$0xff]
    %v127 = vld [vmem:[#allocation6] sm:$0xff]
    %v128 = vpack.c.bf16 %v127, %v127
    %v129 = vld [vmem:[#allocation9] sm:$0xff]
    %v130 = vld [vmem:[#allocation9 + $0x8] sm:$0xff]
    %v133 = vunpack.c.l.b16 %v129
    %v134 = vunpack.c.h.b16 %v129
    %v135 = vunpack.c.l.b16 %v130
    %v136 = vunpack.c.h.b16 %v130
    %v137 = vpack.c.b16 %v133, %v133
    %v138 = vpack.c.b16 %v134, %v134
    %v139 = vpack.c.b16 %v135, %v135
    %v140 = vpack.c.b16 %v136, %v136
    %vm141 = vcmask 64512
    %v143 = vsel %vm141, %v128, 0
    %vm145 = vcmask 1043456
    %v147 = vsel %vm145, %v137, 0
    %v150 = vsel %vm145, %v138, 0
    %v153 = vsel %vm145, %v139, 0
    %v156 = vsel %vm145, %v140, 0
    %158 = vmatpush.bf16.msra.mxu0 0
    %159 = vmatpush.bf16.msra.mxu0 0
    %160 = vmatpush.bf16.msra.mxu0 0
    %161 = vmatpush.bf16.msra.mxu0 0
    %162 = vmatpush.bf16.msra.mxu0 0
    %163 = vmatpush.bf16.msra.mxu0 0
    %164 = vmatpush.bf16.msra.mxu0 0
    %165 = vmatpush.bf16.msra.mxu0 %v147
    %166 = vmatmul.bf16.gmra.mxu0 %v143
    %v167 = vpop.f32.mrf.mxu0
    %v168 = vadd.f32 0.0, %v167
    %v169 = vpop.f32.mrf.mxu0
    %170 = vdwg.mxu0
    %171 = vmatpush.bf16.msra.mxu0 0
    %172 = vmatpush.bf16.msra.mxu0 0
    %173 = vmatpush.bf16.msra.mxu0 0
    %174 = vmatpush.bf16.msra.mxu0 0
    %175 = vmatpush.bf16.msra.mxu0 0
    %176 = vmatpush.bf16.msra.mxu0 0
    %177 = vmatpush.bf16.msra.mxu0 0
    %178 = vmatpush.bf16.msra.mxu0 %v150
    %179 = vmatmul.bf16.gmra.mxu0 %v143
    %v180 = vpop.f32.mrf.mxu0
    %v181 = vadd.f32 0.0, %v180
    %v182 = vpop.f32.mrf.mxu0
    %183 = vdwg.mxu0
    %184 = vmatpush.bf16.msra.mxu0 0
    %185 = vmatpush.bf16.msra.mxu0 0
    %186 = vmatpush.bf16.msra.mxu0 0
    %187 = vmatpush.bf16.msra.mxu0 0
    %188 = vmatpush.bf16.msra.mxu0 0
    %189 = vmatpush.bf16.msra.mxu0 0
    %190 = vmatpush.bf16.msra.mxu0 0
    %191 = vmatpush.bf16.msra.mxu0 %v153
    %192 = vmatmul.bf16.gmra.mxu0 %v143
    %v193 = vpop.f32.mrf.mxu0
    %v194 = vadd.f32 0.0, %v193
    %v195 = vpop.f32.mrf.mxu0
    %196 = vdwg.mxu0
    %197 = vmatpush.bf16.msra.mxu0 0
    %198 = vmatpush.bf16.msra.mxu0 0
    %199 = vmatpush.bf16.msra.mxu0 0
    %200 = vmatpush.bf16.msra.mxu0 0
    %201 = vmatpush.bf16.msra.mxu0 0
    %202 = vmatpush.bf16.msra.mxu0 0
    %203 = vmatpush.bf16.msra.mxu0 0
    %204 = vmatpush.bf16.msra.mxu0 %v156
    %205 = vmatmul.bf16.gmra.mxu0 %v143
    %v206 = vpop.f32.mrf.mxu0
    %v207 = vadd.f32 0.0, %v206
    %v208 = vpop.f32.mrf.mxu0
    %209 = vdwg.mxu0
    %v214 = vunpack.c.l.b16 %v123
    %v215 = vunpack.c.h.b16 %v123
    %v216 = vunpack.c.l.b16 %v124
    %v217 = vunpack.c.h.b16 %v124
    %v218 = vunpack.c.l.b16 %v125
    %v219 = vunpack.c.h.b16 %v125
    %v220 = vunpack.c.l.b16 %v126
    %v221 = vunpack.c.h.b16 %v126
    %v222 = vpack.c.b16 %v218, %v214
    %v223 = vpack.c.b16 %v219, %v215
    %v224 = vpack.c.b16 %v220, %v216
    %v225 = vpack.c.b16 %v221, %v217
    %vm230 = vcmask 130048
    %v232 = vsel %vm230, %v122, 0
    %234 = vmatpush.bf16.msra.mxu0 0
    %235 = vmatpush.bf16.msra.mxu0 0
    %236 = vmatpush.bf16.msra.mxu0 0
    %237 = vmatpush.bf16.msra.mxu0 0
    %238 = vmatpush.bf16.msra.mxu0 0
    %239 = vmatpush.bf16.msra.mxu0 0
    %240 = vmatpush.bf16.msra.mxu0 0
    %241 = vmatpush.bf16.msra.mxu0 %v222
    %242 = vmatmul.bf16.gmra.mxu0 %v232
    %v243 = vpop.f32.mrf.mxu0
    %v244 = vadd.f32 %v168, %v243
    %v245 = vpop.f32.mrf.mxu0
    %246 = vdwg.mxu0
    %247 = vmatpush.bf16.msra.mxu0 0
    %248 = vmatpush.bf16.msra.mxu0 0
    %249 = vmatpush.bf16.msra.mxu0 0
    %250 = vmatpush.bf16.msra.mxu0 0
    %251 = vmatpush.bf16.msra.mxu0 0
    %252 = vmatpush.bf16.msra.mxu0 0
    %253 = vmatpush.bf16.msra.mxu0 0
    %254 = vmatpush.bf16.msra.mxu0 %v223
    %255 = vmatmul.bf16.gmra.mxu0 %v232
    %v256 = vpop.f32.mrf.mxu0
    %v257 = vadd.f32 %v181, %v256
    %v258 = vpop.f32.mrf.mxu0
    %259 = vdwg.mxu0
    %260 = vmatpush.bf16.msra.mxu0 0
    %261 = vmatpush.bf16.msra.mxu0 0
    %262 = vmatpush.bf16.msra.mxu0 0
    %263 = vmatpush.bf16.msra.mxu0 0
    %264 = vmatpush.bf16.msra.mxu0 0
    %265 = vmatpush.bf16.msra.mxu0 0
    %266 = vmatpush.bf16.msra.mxu0 0
    %267 = vmatpush.bf16.msra.mxu0 %v224
    %268 = vmatmul.bf16.gmra.mxu0 %v232
    %v269 = vpop.f32.mrf.mxu0
    %v270 = vadd.f32 %v194, %v269
    %v271 = vpop.f32.mrf.mxu0
    %272 = vdwg.mxu0
    %273 = vmatpush.bf16.msra.mxu0 0
    %274 = vmatpush.bf16.msra.mxu0 0
    %275 = vmatpush.bf16.msra.mxu0 0
    %276 = vmatpush.bf16.msra.mxu0 0
    %277 = vmatpush.bf16.msra.mxu0 0
    %278 = vmatpush.bf16.msra.mxu0 0
    %279 = vmatpush.bf16.msra.mxu0 0
    %280 = vmatpush.bf16.msra.mxu0 %v225
    %281 = vmatmul.bf16.gmra.mxu0 %v232
    %v282 = vpop.f32.mrf.mxu0
    %v283 = vadd.f32 %v207, %v282
    %v284 = vpop.f32.mrf.mxu0
    %285 = vdwg.mxu0
    %v286 = vld [vmem:[%s4] sm:$0xf]
    %v288 = vperm.slane %v286, 0
    %v289 = vperm.slane %v286, 1
    %v290 = vperm.slane %v286, 2
    %v291 = vperm.slane %v286, 3
    %v296 = vadd.f32 %v244, %v288
    %v297 = vadd.f32 %v257, %v289
    %v298 = vadd.f32 %v270, %v290
    %v299 = vadd.f32 %v283, %v291
    %v300 = vmax.f32 %v296, 0.0
    %v301 = vmax.f32 %v297, 0.0
    %v302 = vmax.f32 %v298, 0.0
    %v303 = vmax.f32 %v299, 0.0
    %v304 = vpack.c.bf16 %v300, %v300
    %v305 = vpack.c.bf16 %v301, %v301
    %v306 = vpack.c.bf16 %v302, %v302
    %v307 = vpack.c.bf16 %v303, %v303
    %v308 = vld [vmem:[#allocation11] sm:$0xff]
    %v309 = vld [vmem:[#allocation11 + $0x8] sm:$0xf]
    %v310 = vld [vmem:[#allocation11 + $0xc] sm:$0xff]
    %v311 = vld [vmem:[#allocation11 + $0x14] sm:$0xf]
    %v312 = vld [vmem:[#allocation11 + $0x18] sm:$0xff]
    %v313 = vld [vmem:[#allocation11 + $0x20] sm:$0xf]
    %v314 = vld [vmem:[#allocation11 + $0x24] sm:$0xff]
    %v315 = vld [vmem:[#allocation11 + $0x2c] sm:$0xf]
    %v316 = vld [vmem:[#allocation11 + $0x30] sm:$0xff]
    %v317 = vld [vmem:[#allocation11 + $0x38] sm:$0xf]
    %v318 = vld [vmem:[#allocation11 + $0x3c] sm:$0xff]
    %v319 = vld [vmem:[#allocation11 + $0x44] sm:$0xf]
    %v320 = vld [vmem:[#allocation11 + $0x48] sm:$0xff]
    %v321 = vld [vmem:[#allocation11 + $0x50] sm:$0xf]
    %v322 = vld [vmem:[#allocation11 + $0x54] sm:$0xff]
    %v323 = vld [vmem:[#allocation11 + $0x5c] sm:$0xf]
    %v324 = vld [vmem:[#allocation11 + $0x60] sm:$0xff]
    %v325 = vld [vmem:[#allocation11 + $0x68] sm:$0xf]
    %v326 = vld [vmem:[#allocation11 + $0x6c] sm:$0xff]
    %v327 = vld [vmem:[#allocation11 + $0x74] sm:$0xf]
    %v328 = vld [vmem:[#allocation11 + $0x78] sm:$0xff]
    %v329 = vld [vmem:[#allocation11 + $0x80] sm:$0xf]
    %v330 = vld [vmem:[#allocation11 + $0x84] sm:$0xff]
    %v331 = vld [vmem:[#allocation11 + $0x8c] sm:$0xf]
    %v332 = vld [vmem:[#allocation11 + $0x90] sm:$0xff]
    %v333 = vld [vmem:[#allocation11 + $0x98] sm:$0xf]
    %v334 = vld [vmem:[#allocation11 + $0x9c] sm:$0xff]
    %v335 = vld [vmem:[#allocation11 + $0xa4] sm:$0xf]
    %v336 = vld [vmem:[#allocation11 + $0xa8] sm:$0xff]
    %v337 = vld [vmem:[#allocation11 + $0xb0] sm:$0xf]
    %v338 = vld [vmem:[#allocation11 + $0xb4] sm:$0xff]
    %v339 = vld [vmem:[#allocation11 + $0xbc] sm:$0xf]
    %v340 = vld [vmem:[#allocation11 + $0xc0] sm:$0xff]
    %v341 = vld [vmem:[#allocation11 + $0xc8] sm:$0xf]
    %v342 = vld [vmem:[#allocation11 + $0xcc] sm:$0xff]
    %v343 = vld [vmem:[#allocation11 + $0xd4] sm:$0xf]
    %v344 = vld [vmem:[#allocation11 + $0xd8] sm:$0xff]
    %v345 = vld [vmem:[#allocation11 + $0xe0] sm:$0xf]
    %v346 = vld [vmem:[#allocation11 + $0xe4] sm:$0xff]
    %v347 = vld [vmem:[#allocation11 + $0xec] sm:$0xf]
    %v348 = vld [vmem:[#allocation11 + $0xf0] sm:$0xff]
    %v349 = vld [vmem:[#allocation11 + $0xf8] sm:$0xf]
    %v350 = vld [vmem:[#allocation11 + $0xfc] sm:$0xff]
    %v351 = vld [vmem:[#allocation11 + $0x104] sm:$0xf]
    %v352 = vld [vmem:[#allocation11 + $0x108] sm:$0xff]
    %v353 = vld [vmem:[#allocation11 + $0x110] sm:$0xf]
    %v354 = vld [vmem:[#allocation11 + $0x114] sm:$0xff]
    %v355 = vld [vmem:[#allocation11 + $0x11c] sm:$0xf]
    %v356 = vld [vmem:[#allocation11 + $0x120] sm:$0xff]
    %v357 = vld [vmem:[#allocation11 + $0x128] sm:$0xf]
    %v358 = vld [vmem:[#allocation11 + $0x12c] sm:$0xff]
    %v359 = vld [vmem:[#allocation11 + $0x134] sm:$0xf]
    %v360 = vld [vmem:[#allocation11 + $0x138] sm:$0xff]
    %v361 = vld [vmem:[#allocation11 + $0x140] sm:$0xf]
    %v362 = vld [vmem:[#allocation11 + $0x144] sm:$0xff]
    %v363 = vld [vmem:[#allocation11 + $0x14c] sm:$0xf]
    %v364 = vld [vmem:[#allocation11 + $0x150] sm:$0xff]
    %v365 = vld [vmem:[#allocation11 + $0x158] sm:$0xf]
    %v366 = vld [vmem:[#allocation11 + $0x15c] sm:$0xff]
    %v367 = vld [vmem:[#allocation11 + $0x164] sm:$0xf]
    %v368 = vld [vmem:[#allocation11 + $0x168] sm:$0xff]
    %v369 = vld [vmem:[#allocation11 + $0x170] sm:$0xf]
    %v370 = vld [vmem:[#allocation11 + $0x174] sm:$0xff]
    %v371 = vld [vmem:[#allocation11 + $0x17c] sm:$0xf]
    %v372 = vld [vmem:[#allocation11 + $0x180] sm:$0xff]
    %v373 = vld [vmem:[#allocation11 + $0x188] sm:$0xf]
    %v374 = vld [vmem:[#allocation11 + $0x18c] sm:$0xff]
    %v375 = vld [vmem:[#allocation11 + $0x194] sm:$0xf]
    %v376 = vld [vmem:[#allocation11 + $0x198] sm:$0xff]
    %v377 = vld [vmem:[#allocation11 + $0x1a0] sm:$0xf]
    %v378 = vld [vmem:[#allocation11 + $0x1a4] sm:$0xff]
    %v379 = vld [vmem:[#allocation11 + $0x1ac] sm:$0xf]
    %v380 = vld [vmem:[#allocation11 + $0x1b0] sm:$0xff]
    %v381 = vld [vmem:[#allocation11 + $0x1b8] sm:$0xf]
    %v382 = vld [vmem:[#allocation11 + $0x1bc] sm:$0xff]
    %v383 = vld [vmem:[#allocation11 + $0x1c4] sm:$0xf]
    %v384 = vld [vmem:[#allocation11 + $0x1c8] sm:$0xff]
    %v385 = vld [vmem:[#allocation11 + $0x1d0] sm:$0xf]
    %v386 = vld [vmem:[#allocation11 + $0x1d4] sm:$0xff]
    %v387 = vld [vmem:[#allocation11 + $0x1dc] sm:$0xf]
    %v388 = vld [vmem:[#allocation11 + $0x1e0] sm:$0xff]
    %v389 = vld [vmem:[#allocation11 + $0x1e8] sm:$0xf]
    %v390 = vld [vmem:[#allocation11 + $0x1ec] sm:$0xff]
    %v391 = vld [vmem:[#allocation11 + $0x1f4] sm:$0xf]
    %v392 = vld [vmem:[#allocation11 + $0x1f8] sm:$0xff]
    %v393 = vld [vmem:[#allocation11 + $0x200] sm:$0xf]
    %v394 = vld [vmem:[#allocation11 + $0x204] sm:$0xff]
    %v395 = vld [vmem:[#allocation11 + $0x20c] sm:$0xf]
    %v396 = vld [vmem:[#allocation11 + $0x210] sm:$0xff]
    %v397 = vld [vmem:[#allocation11 + $0x218] sm:$0xf]
    %v398 = vld [vmem:[#allocation11 + $0x21c] sm:$0xff]
    %v399 = vld [vmem:[#allocation11 + $0x224] sm:$0xf]
    %v400 = vld [vmem:[#allocation11 + $0x228] sm:$0xff]
    %v401 = vld [vmem:[#allocation11 + $0x230] sm:$0xf]
    %v402 = vld [vmem:[#allocation11 + $0x234] sm:$0xff]
    %v403 = vld [vmem:[#allocation11 + $0x23c] sm:$0xf]
    %v404 = vld [vmem:[#allocation11 + $0x240] sm:$0xff]
    %v405 = vld [vmem:[#allocation11 + $0x248] sm:$0xf]
    %v406 = vld [vmem:[#allocation11 + $0x24c] sm:$0xff]
    %v407 = vld [vmem:[#allocation11 + $0x254] sm:$0xf]
    %v408 = vld [vmem:[%s6] sm:$0x7]
    %v410 = vperm.slane %v408, 0
    %v411 = vperm.slane %v408, 1
    %v412 = vperm.slane %v408, 2
    %v516 = vunpack.c.l.b16 %v308
    %v517 = vunpack.c.h.b16 %v308
    %v518 = vunpack.c.l.b16 %v309
    %v519 = vunpack.c.l.b16 %v310
    %v520 = vunpack.c.h.b16 %v310
    %v521 = vunpack.c.l.b16 %v311
    %v522 = vunpack.c.l.b16 %v312
    %v523 = vunpack.c.h.b16 %v312
    %v524 = vunpack.c.l.b16 %v313
    %v525 = vunpack.c.l.b16 %v314
    %v526 = vunpack.c.h.b16 %v314
    %v527 = vunpack.c.l.b16 %v315
    %v528 = vunpack.c.l.b16 %v316
    %v529 = vunpack.c.h.b16 %v316
    %v530 = vunpack.c.l.b16 %v317
    %v531 = vunpack.c.l.b16 %v318
    %v532 = vunpack.c.h.b16 %v318
    %v533 = vunpack.c.l.b16 %v319
    %v534 = vunpack.c.l.b16 %v320
    %v535 = vunpack.c.h.b16 %v320
    %v536 = vunpack.c.l.b16 %v321
    %v537 = vunpack.c.l.b16 %v322
    %v538 = vunpack.c.h.b16 %v322
    %v539 = vunpack.c.l.b16 %v323
    %v540 = vunpack.c.l.b16 %v324
    %v541 = vunpack.c.h.b16 %v324
    %v542 = vunpack.c.l.b16 %v325
    %v543 = vunpack.c.l.b16 %v326
    %v544 = vunpack.c.h.b16 %v326
    %v545 = vunpack.c.l.b16 %v327
    %v546 = vunpack.c.l.b16 %v328
    %v547 = vunpack.c.h.b16 %v328
    %v548 = vunpack.c.l.b16 %v329
    %v549 = vunpack.c.l.b16 %v330
    %v550 = vunpack.c.h.b16 %v330
    %v551 = vunpack.c.l.b16 %v331
    %v552 = vunpack.c.l.b16 %v332
    %v553 = vunpack.c.h.b16 %v332
    %v554 = vunpack.c.l.b16 %v333
    %v555 = vunpack.c.l.b16 %v334
    %v556 = vunpack.c.h.b16 %v334
    %v557 = vunpack.c.l.b16 %v335
    %v558 = vunpack.c.l.b16 %v336
    %v559 = vunpack.c.h.b16 %v336
    %v560 = vunpack.c.l.b16 %v337
    %v561 = vunpack.c.l.b16 %v338
    %v562 = vunpack.c.h.b16 %v338
    %v563 = vunpack.c.l.b16 %v339
    %v564 = vunpack.c.l.b16 %v340
    %v565 = vunpack.c.h.b16 %v340
    %v566 = vunpack.c.l.b16 %v341
    %v567 = vunpack.c.l.b16 %v342
    %v568 = vunpack.c.h.b16 %v342
    %v569 = vunpack.c.l.b16 %v343
    %v570 = vunpack.c.l.b16 %v344
    %v571 = vunpack.c.h.b16 %v344
    %v572 = vunpack.c.l.b16 %v345
    %v573 = vunpack.c.l.b16 %v346
    %v574 = vunpack.c.h.b16 %v346
    %v575 = vunpack.c.l.b16 %v347
    %v576 = vunpack.c.l.b16 %v348
    %v577 = vunpack.c.h.b16 %v348
    %v578 = vunpack.c.l.b16 %v349
    %v579 = vunpack.c.l.b16 %v350
    %v580 = vunpack.c.h.b16 %v350
    %v581 = vunpack.c.l.b16 %v351
    %v582 = vunpack.c.l.b16 %v352
    %v583 = vunpack.c.h.b16 %v352
    %v584 = vunpack.c.l.b16 %v353
    %v585 = vunpack.c.l.b16 %v354
    %v586 = vunpack.c.h.b16 %v354
    %v587 = vunpack.c.l.b16 %v355
    %v588 = vunpack.c.l.b16 %v356
    %v589 = vunpack.c.h.b16 %v356
    %v590 = vunpack.c.l.b16 %v357
    %v591 = vunpack.c.l.b16 %v358
    %v592 = vunpack.c.h.b16 %v358
    %v593 = vunpack.c.l.b16 %v359
    %v594 = vunpack.c.l.b16 %v360
    %v595 = vunpack.c.h.b16 %v360
    %v596 = vunpack.c.l.b16 %v361
    %v597 = vunpack.c.l.b16 %v362
    %v598 = vunpack.c.h.b16 %v362
    %v599 = vunpack.c.l.b16 %v363
    %v600 = vunpack.c.l.b16 %v364
    %v601 = vunpack.c.h.b16 %v364
    %v602 = vunpack.c.l.b16 %v365
    %v603 = vunpack.c.l.b16 %v366
    %v604 = vunpack.c.h.b16 %v366
    %v605 = vunpack.c.l.b16 %v367
    %v606 = vunpack.c.l.b16 %v368
    %v607 = vunpack.c.h.b16 %v368
    %v608 = vunpack.c.l.b16 %v369
    %v609 = vunpack.c.l.b16 %v370
    %v610 = vunpack.c.h.b16 %v370
    %v611 = vunpack.c.l.b16 %v371
    %v612 = vunpack.c.l.b16 %v372
    %v613 = vunpack.c.h.b16 %v372
    %v614 = vunpack.c.l.b16 %v373
    %v615 = vunpack.c.l.b16 %v374
    %v616 = vunpack.c.h.b16 %v374
    %v617 = vunpack.c.l.b16 %v375
    %v618 = vunpack.c.l.b16 %v376
    %v619 = vunpack.c.h.b16 %v376
    %v620 = vunpack.c.l.b16 %v377
    %v621 = vunpack.c.l.b16 %v378
    %v622 = vunpack.c.h.b16 %v378
    %v623 = vunpack.c.l.b16 %v379
    %v624 = vunpack.c.l.b16 %v380
    %v625 = vunpack.c.h.b16 %v380
    %v626 = vunpack.c.l.b16 %v381
    %v627 = vunpack.c.l.b16 %v382
    %v628 = vunpack.c.h.b16 %v382
    %v629 = vunpack.c.l.b16 %v383
    %v630 = vunpack.c.l.b16 %v384
    %v631 = vunpack.c.h.b16 %v384
    %v632 = vunpack.c.l.b16 %v385
    %v633 = vunpack.c.l.b16 %v386
    %v634 = vunpack.c.h.b16 %v386
    %v635 = vunpack.c.l.b16 %v387
    %v636 = vunpack.c.l.b16 %v388
    %v637 = vunpack.c.h.b16 %v388
    %v638 = vunpack.c.l.b16 %v389
    %v639 = vunpack.c.l.b16 %v390
    %v640 = vunpack.c.h.b16 %v390
    %v641 = vunpack.c.l.b16 %v391
    %v642 = vunpack.c.l.b16 %v392
    %v643 = vunpack.c.h.b16 %v392
    %v644 = vunpack.c.l.b16 %v393
    %v645 = vunpack.c.l.b16 %v394
    %v646 = vunpack.c.h.b16 %v394
    %v647 = vunpack.c.l.b16 %v395
    %v648 = vunpack.c.l.b16 %v396
    %v649 = vunpack.c.h.b16 %v396
    %v650 = vunpack.c.l.b16 %v397
    %v651 = vunpack.c.l.b16 %v398
    %v652 = vunpack.c.h.b16 %v398
    %v653 = vunpack.c.l.b16 %v399
    %v654 = vunpack.c.l.b16 %v400
    %v655 = vunpack.c.h.b16 %v400
    %v656 = vunpack.c.l.b16 %v401
    %v657 = vunpack.c.l.b16 %v402
    %v658 = vunpack.c.h.b16 %v402
    %v659 = vunpack.c.l.b16 %v403
    %v660 = vunpack.c.l.b16 %v404
    %v661 = vunpack.c.h.b16 %v404
    %v662 = vunpack.c.l.b16 %v405
    %v663 = vunpack.c.l.b16 %v406
    %v664 = vunpack.c.h.b16 %v406
    %v665 = vunpack.c.l.b16 %v407
    %v666 = vpack.c.b16 %v519, %v516
    %v667 = vpack.c.b16 %v520, %v517
    %v668 = vpack.c.b16 %v521, %v518
    %v669 = vpack.c.b16 %v525, %v522
    %v670 = vpack.c.b16 %v526, %v523
    %v671 = vpack.c.b16 %v527, %v524
    %v672 = vpack.c.b16 %v531, %v528
    %v673 = vpack.c.b16 %v532, %v529
    %v674 = vpack.c.b16 %v533, %v530
    %v675 = vpack.c.b16 %v537, %v534
    %v676 = vpack.c.b16 %v538, %v535
    %v677 = vpack.c.b16 %v539, %v536
    %v678 = vpack.c.b16 %v543, %v540
    %v679 = vpack.c.b16 %v544, %v541
    %v680 = vpack.c.b16 %v545, %v542
    %v681 = vpack.c.b16 %v549, %v546
    %v682 = vpack.c.b16 %v550, %v547
    %v683 = vpack.c.b16 %v551, %v548
    %v684 = vpack.c.b16 %v555, %v552
    %v685 = vpack.c.b16 %v556, %v553
    %v686 = vpack.c.b16 %v557, %v554
    %v687 = vpack.c.b16 %v561, %v558
    %v688 = vpack.c.b16 %v562, %v559
    %v689 = vpack.c.b16 %v563, %v560
    %v690 = vpack.c.b16 %v567, %v564
    %v691 = vpack.c.b16 %v568, %v565
    %v692 = vpack.c.b16 %v569, %v566
    %v693 = vpack.c.b16 %v573, %v570
    %v694 = vpack.c.b16 %v574, %v571
    %v695 = vpack.c.b16 %v575, %v572
    %v696 = vpack.c.b16 %v579, %v576
    %v697 = vpack.c.b16 %v580, %v577
    %v698 = vpack.c.b16 %v581, %v578
    %v699 = vpack.c.b16 %v585, %v582
    %v700 = vpack.c.b16 %v586, %v583
    %v701 = vpack.c.b16 %v587, %v584
    %v702 = vpack.c.b16 %v591, %v588
    %v703 = vpack.c.b16 %v592, %v589
    %v704 = vpack.c.b16 %v593, %v590
    %v705 = vpack.c.b16 %v597, %v594
    %v706 = vpack.c.b16 %v598, %v595
    %v707 = vpack.c.b16 %v599, %v596
    %v708 = vpack.c.b16 %v603, %v600
    %v709 = vpack.c.b16 %v604, %v601
    %v710 = vpack.c.b16 %v605, %v602
    %v711 = vpack.c.b16 %v609, %v606
    %v712 = vpack.c.b16 %v610, %v607
    %v713 = vpack.c.b16 %v611, %v608
    %v714 = vpack.c.b16 %v615, %v612
    %v715 = vpack.c.b16 %v616, %v613
    %v716 = vpack.c.b16 %v617, %v614
    %v717 = vpack.c.b16 %v621, %v618
    %v718 = vpack.c.b16 %v622, %v619
    %v719 = vpack.c.b16 %v623, %v620
    %v720 = vpack.c.b16 %v627, %v624
    %v721 = vpack.c.b16 %v628, %v625
    %v722 = vpack.c.b16 %v629, %v626
    %v723 = vpack.c.b16 %v633, %v630
    %v724 = vpack.c.b16 %v634, %v631
    %v725 = vpack.c.b16 %v635, %v632
    %v726 = vpack.c.b16 %v639, %v636
    %v727 = vpack.c.b16 %v640, %v637
    %v728 = vpack.c.b16 %v641, %v638
    %v729 = vpack.c.b16 %v645, %v642
    %v730 = vpack.c.b16 %v646, %v643
    %v731 = vpack.c.b16 %v647, %v644
    %v732 = vpack.c.b16 %v651, %v648
    %v733 = vpack.c.b16 %v652, %v649
    %v734 = vpack.c.b16 %v653, %v650
    %v735 = vpack.c.b16 %v657, %v654
    %v736 = vpack.c.b16 %v658, %v655
    %v737 = vpack.c.b16 %v659, %v656
    %v738 = vpack.c.b16 %v663, %v660
    %v739 = vpack.c.b16 %v664, %v661
    %v740 = vpack.c.b16 %v665, %v662
    %v817 = vsel %vm230, %v307, 0
    %819 = vmatpush.bf16.msra.mxu0 %v687
    %820 = vmatpush.bf16.msra.mxu0 %v684
    %821 = vmatpush.bf16.msra.mxu0 %v681
    %822 = vmatpush.bf16.msra.mxu0 %v678
    %823 = vmatpush.bf16.msra.mxu0 %v675
    %824 = vmatpush.bf16.msra.mxu0 %v672
    %825 = vmatpush.bf16.msra.mxu0 %v669
    %826 = vmatpush.bf16.msra.mxu0 %v666
    %827 = vmatmul.bf16.gmra.mxu0 %v304
    %v828 = vpop.f32.mrf.mxu0
    %v829 = vadd.f32 %v410, %v828
    %v830 = vpop.f32.mrf.mxu0
    %831 = vdwg.mxu0
    %832 = vmatpush.bf16.msra.mxu0 %v711
    %833 = vmatpush.bf16.msra.mxu0 %v708
    %834 = vmatpush.bf16.msra.mxu0 %v705
    %835 = vmatpush.bf16.msra.mxu0 %v702
    %836 = vmatpush.bf16.msra.mxu0 %v699
    %837 = vmatpush.bf16.msra.mxu0 %v696
    %838 = vmatpush.bf16.msra.mxu0 %v693
    %839 = vmatpush.bf16.msra.mxu0 %v690
    %840 = vmatmul.bf16.gmra.mxu0 %v305
    %v841 = vpop.f32.mrf.mxu0
    %v842 = vadd.f32 %v829, %v841
    %v843 = vpop.f32.mrf.mxu0
    %844 = vdwg.mxu0
    %845 = vmatpush.bf16.msra.mxu0 %v735
    %846 = vmatpush.bf16.msra.mxu0 %v732
    %847 = vmatpush.bf16.msra.mxu0 %v729
    %848 = vmatpush.bf16.msra.mxu0 %v726
    %849 = vmatpush.bf16.msra.mxu0 %v723
    %850 = vmatpush.bf16.msra.mxu0 %v720
    %851 = vmatpush.bf16.msra.mxu0 %v717
    %852 = vmatpush.bf16.msra.mxu0 %v714
    %853 = vmatmul.bf16.gmra.mxu0 %v306
    %v854 = vpop.f32.mrf.mxu0
    %v855 = vadd.f32 %v842, %v854
    %v856 = vpop.f32.mrf.mxu0
    %857 = vdwg.mxu0
    %858 = vmatpush.bf16.msra.mxu0 0
    %859 = vmatpush.bf16.msra.mxu0 0
    %860 = vmatpush.bf16.msra.mxu0 0
    %861 = vmatpush.bf16.msra.mxu0 0
    %862 = vmatpush.bf16.msra.mxu0 0
    %863 = vmatpush.bf16.msra.mxu0 0
    %864 = vmatpush.bf16.msra.mxu0 0
    %865 = vmatpush.bf16.msra.mxu0 %v738
    %866 = vmatmul.bf16.gmra.mxu0 %v817
    %v867 = vpop.f32.mrf.mxu0
    %v868 = vadd.f32 %v855, %v867
    %v869 = vpop.f32.mrf.mxu0
    %870 = vdwg.mxu0
    %871 = vmatpush.bf16.msra.mxu0 %v688
    %872 = vmatpush.bf16.msra.mxu0 %v685
    %873 = vmatpush.bf16.msra.mxu0 %v682
    %874 = vmatpush.bf16.msra.mxu0 %v679
    %875 = vmatpush.bf16.msra.mxu0 %v676
    %876 = vmatpush.bf16.msra.mxu0 %v673
    %877 = vmatpush.bf16.msra.mxu0 %v670
    %878 = vmatpush.bf16.msra.mxu0 %v667
    %879 = vmatmul.bf16.gmra.mxu0 %v304
    %v880 = vpop.f32.mrf.mxu0
    %v881 = vadd.f32 %v411, %v880
    %v882 = vpop.f32.mrf.mxu0
    %883 = vdwg.mxu0
    %884 = vmatpush.bf16.msra.mxu0 %v712
    %885 = vmatpush.bf16.msra.mxu0 %v709
    %886 = vmatpush.bf16.msra.mxu0 %v706
    %887 = vmatpush.bf16.msra.mxu0 %v703
    %888 = vmatpush.bf16.msra.mxu0 %v700
    %889 = vmatpush.bf16.msra.mxu0 %v697
    %890 = vmatpush.bf16.msra.mxu0 %v694
    %891 = vmatpush.bf16.msra.mxu0 %v691
    %892 = vmatmul.bf16.gmra.mxu0 %v305
    %v893 = vpop.f32.mrf.mxu0
    %v894 = vadd.f32 %v881, %v893
    %v895 = vpop.f32.mrf.mxu0
    %896 = vdwg.mxu0
    %897 = vmatpush.bf16.msra.mxu0 %v736
    %898 = vmatpush.bf16.msra.mxu0 %v733
    %899 = vmatpush.bf16.msra.mxu0 %v730
    %900 = vmatpush.bf16.msra.mxu0 %v727
    %901 = vmatpush.bf16.msra.mxu0 %v724
    %902 = vmatpush.bf16.msra.mxu0 %v721
    %903 = vmatpush.bf16.msra.mxu0 %v718
    %904 = vmatpush.bf16.msra.mxu0 %v715
    %905 = vmatmul.bf16.gmra.mxu0 %v306
    %v906 = vpop.f32.mrf.mxu0
    %v907 = vadd.f32 %v894, %v906
    %v908 = vpop.f32.mrf.mxu0
    %909 = vdwg.mxu0
    %910 = vmatpush.bf16.msra.mxu0 0
    %911 = vmatpush.bf16.msra.mxu0 0
    %912 = vmatpush.bf16.msra.mxu0 0
    %913 = vmatpush.bf16.msra.mxu0 0
    %914 = vmatpush.bf16.msra.mxu0 0
    %915 = vmatpush.bf16.msra.mxu0 0
    %916 = vmatpush.bf16.msra.mxu0 0
    %917 = vmatpush.bf16.msra.mxu0 %v739
    %918 = vmatmul.bf16.gmra.mxu0 %v817
    %v919 = vpop.f32.mrf.mxu0
    %v920 = vadd.f32 %v907, %v919
    %v921 = vpop.f32.mrf.mxu0
    %922 = vdwg.mxu0
    %923 = vmatpush.bf16.msra.mxu0 %v689
    %924 = vmatpush.bf16.msra.mxu0 %v686
    %925 = vmatpush.bf16.msra.mxu0 %v683
    %926 = vmatpush.bf16.msra.mxu0 %v680
    %927 = vmatpush.bf16.msra.mxu0 %v677
    %928 = vmatpush.bf16.msra.mxu0 %v674
    %929 = vmatpush.bf16.msra.mxu0 %v671
    %930 = vmatpush.bf16.msra.mxu0 %v668
    %931 = vmatmul.bf16.gmra.mxu0 %v304
    %v932 = vpop.f32.mrf.mxu0
    %v933 = vadd.f32 %v412, %v932
    %v934 = vpop.f32.mrf.mxu0
    %935 = vdwg.mxu0
    %936 = vmatpush.bf16.msra.mxu0 %v713
    %937 = vmatpush.bf16.msra.mxu0 %v710
    %938 = vmatpush.bf16.msra.mxu0 %v707
    %939 = vmatpush.bf16.msra.mxu0 %v704
    %940 = vmatpush.bf16.msra.mxu0 %v701
    %941 = vmatpush.bf16.msra.mxu0 %v698
    %942 = vmatpush.bf16.msra.mxu0 %v695
    %943 = vmatpush.bf16.msra.mxu0 %v692
    %944 = vmatmul.bf16.gmra.mxu0 %v305
    %v945 = vpop.f32.mrf.mxu0
    %v946 = vadd.f32 %v933, %v945
    %v947 = vpop.f32.mrf.mxu0
    %948 = vdwg.mxu0
    %949 = vmatpush.bf16.msra.mxu0 %v737
    %950 = vmatpush.bf16.msra.mxu0 %v734
    %951 = vmatpush.bf16.msra.mxu0 %v731
    %952 = vmatpush.bf16.msra.mxu0 %v728
    %953 = vmatpush.bf16.msra.mxu0 %v725
    %954 = vmatpush.bf16.msra.mxu0 %v722
    %955 = vmatpush.bf16.msra.mxu0 %v719
    %956 = vmatpush.bf16.msra.mxu0 %v716
    %957 = vmatmul.bf16.gmra.mxu0 %v306
    %v958 = vpop.f32.mrf.mxu0
    %v959 = vadd.f32 %v946, %v958
    %v960 = vpop.f32.mrf.mxu0
    %961 = vdwg.mxu0
    %962 = vmatpush.bf16.msra.mxu0 0
    %963 = vmatpush.bf16.msra.mxu0 0
    %964 = vmatpush.bf16.msra.mxu0 0
    %965 = vmatpush.bf16.msra.mxu0 0
    %966 = vmatpush.bf16.msra.mxu0 0
    %967 = vmatpush.bf16.msra.mxu0 0
    %968 = vmatpush.bf16.msra.mxu0 0
    %969 = vmatpush.bf16.msra.mxu0 %v740
    %970 = vmatmul.bf16.gmra.mxu0 %v817
    %v971 = vpop.f32.mrf.mxu0
    %v972 = vadd.f32 %v959, %v971
    %v973 = vpop.f32.mrf.mxu0
    %974 = vdwg.mxu0
    %v975 = vmax.f32 %v868, 0.0
    %v976 = vmax.f32 %v920, 0.0
    %v977 = vmax.f32 %v972, 0.0
    %v978 = vpack.c.bf16 %v975, %v975
    %v979 = vpack.c.bf16 %v976, %v976
    %v980 = vpack.c.bf16 %v977, %v977
    %v981 = vld [vmem:[#allocation12] sm:$0x7]
    %s982 = sld [smem:[#allocation2]]
    %v983 = vstv %s982
    %985 = vst [vmem:[#allocation1] ss:$9 sm:$0xff] %v981
    %v986 = vld [vmem:[#allocation1] sm:$0xff]
    %v987 = vld [vmem:[#allocation1 + $0x9] sm:$0xff]
    %v988 = vld [vmem:[#allocation1 + $0x12] sm:$0xff]
    %vm991 = vcmask 359424
    %v992 = vsel %vm991, %v988, 0
    %v995 = vsel %vm991, %v980, 0
    %997 = vmatpush.bf16.xpose.msra.mxu0 0
    %998 = vmatpush.bf16.xpose.msra.mxu0 0
    %999 = vmatpush.bf16.xpose.msra.mxu0 0
    %1000 = vmatpush.bf16.xpose.msra.mxu0 0
    %1001 = vmatpush.bf16.xpose.msra.mxu0 0
    %1002 = vmatpush.bf16.xpose.msra.mxu0 0
    %1003 = vmatpush.bf16.xpose.msra.mxu0 0
    %1004 = vmatpush.bf16.xpose.msra.mxu0 %v978
    %1005 = vmatmul.bf16.gmra.mxu0 %v986
    %v1006 = vpop.f32.mrf.mxu0
    %v1007 = vadd.f32 %v983, %v1006
    %v1008 = vpop.f32.mrf.mxu0
    %1009 = vdwg.mxu0
    %1010 = vmatpush.bf16.xpose.msra.mxu0 0
    %1011 = vmatpush.bf16.xpose.msra.mxu0 0
    %1012 = vmatpush.bf16.xpose.msra.mxu0 0
    %1013 = vmatpush.bf16.xpose.msra.mxu0 0
    %1014 = vmatpush.bf16.xpose.msra.mxu0 0
    %1015 = vmatpush.bf16.xpose.msra.mxu0 0
    %1016 = vmatpush.bf16.xpose.msra.mxu0 0
    %1017 = vmatpush.bf16.xpose.msra.mxu0 %v979
    %1018 = vmatmul.bf16.gmra.mxu0 %v987
    %v1019 = vpop.f32.mrf.mxu0
    %v1020 = vadd.f32 %v1007, %v1019
    %v1021 = vpop.f32.mrf.mxu0
    %1022 = vdwg.mxu0
    %1023 = vmatpush.bf16.xpose.msra.mxu0 0
    %1024 = vmatpush.bf16.xpose.msra.mxu0 0
    %1025 = vmatpush.bf16.xpose.msra.mxu0 0
    %1026 = vmatpush.bf16.xpose.msra.mxu0 0
    %1027 = vmatpush.bf16.xpose.msra.mxu0 0
    %1028 = vmatpush.bf16.xpose.msra.mxu0 0
    %1029 = vmatpush.bf16.xpose.msra.mxu0 0
    %1030 = vmatpush.bf16.xpose.msra.mxu0 %v995
    %1031 = vmatmul.bf16.gmra.mxu0 %v992
    %v1032 = vpop.f32.mrf.mxu0
    %v1033 = vadd.f32 %v1020, %v1032
    %v1034 = vpop.f32.mrf.mxu0
    %1035 = vdwg.mxu0
    %vm1036 = vcmask 57344
    %1037 = vst.msk [vmem:[#allocation14] sm:$0x1] %vm1036, %v1033
    // Predicated region
    $region62: #{tpu_custom_call.1} parent=1 // pred_check
      _
    $region63: #{tpu_custom_call.1} parent=1 // pred_check_branch
      %1039 = sbr.rel (0) target = $region65
    $region64: #{tpu_custom_call.1} parent=1 // pred_region
      %1041 = vsyncadd [#allocation5], 0
      %s1043 = sshll.u32 [#allocation14], 4
      %s1044 = int_to_ptr.vmem [resolvable:$true] %s1043
      %s1045 = sshll.u32 %s9, 4
      %s1046 = int_to_ptr.hbm [resolvable:$true] %s1045
      %1048 = dma.vmem_to_hbm [thread:$0]  %s1044, 16, %s1046, [#allocation5]
    $region65: #{tpu_custom_call.1} parent=1 // pred_fallthru
      _
    // Predicated region
    $region66: #{tpu_custom_call.1} parent=1 // pred_check
      _
    $region67: #{tpu_custom_call.1} parent=1 // pred_check_branch
      %1050 = sbr.rel (0) target = $region69
    $region68: #{tpu_custom_call.1} parent=1 // pred_region
      %1052 = dma.done [#allocation5], 16
    $region69: #{tpu_custom_call.1} parent=1 // pred_fallthru
      _
    %1053 = vsyncpa [#allocation4], 1
    %1054 = vsyncpa [#allocation7], 1
    %1055 = vsyncpa [#allocation10], 1
    %1056 = vsyncpa [#allocation13], 1
    %1057 = vsyncpa [#allocation5], 1

</llo_original>
